<compile_context>
chip_gen: v7x
topology: tpu7x:2x2x1
jax: 0.10.0
libtpu: 0.0.40
codegen_flags: <defaults>
</compile_context>

<pallas_src>
import functools
import math

import jax
import jax.numpy as jnp
from jax.experimental import pallas as pl
from jax.experimental.pallas import tpu as pltpu

_LANES = 128
_INNER_ROWS = 64                        # (64,128) f32 = 8 vregs per chunk per input
_TARGET_STEP_BYTES = 8 * 1024 * 1024    # both inputs combined per grid step (~4 MiB each)
_VMEM_LIMIT_BYTES = 40 * 1024 * 1024    # covers 2 inputs x 2 buffers x 4 MiB + outputs


def _cdiv(a, b):
    return -(-a // b)


def _round_up(v, m):
    return _cdiv(v, m) * m


def _dice_sums_kernel(x_ref, y_ref, sxy_ref, ssum_ref, *,
                      blk_rows, chunks_per_split, total_rows, needs_gate, unroll):
    """Accumulates per-(row,lane) partials of x*y and x+y into VMEM-resident outputs."""
    s = pl.program_id(0)   # parallel split (megacore)
    i = pl.program_id(1)   # reduction chunk within the split

    @pl.when(i == 0)
    def _init():
        sxy_ref[...] = jnp.zeros_like(sxy_ref)
        ssum_ref[...] = jnp.zeros_like(ssum_ref)

    # UNclamped block index: <=0 rows left for fully out-of-range clamped blocks,
    # so they contribute nothing (their DMA is clamped in the index_map).
    block_idx = s * chunks_per_split + i
    rows_left = total_rows - block_idx * blk_rows
    n_inner = blk_rows // _INNER_ROWS

    def accumulate(masked):
        def body(j, carry):
            acc_xy, acc_s = carry
            start = pl.multiple_of(j * _INNER_ROWS, _INNER_ROWS)
            x = x_ref[pl.ds(start, _INNER_ROWS), :].astype(jnp.float32)
            y = y_ref[pl.ds(start, _INNER_ROWS), :].astype(jnp.float32)
            if masked:
                # Zero whole rows past the end of the array *before* any
                # arithmetic (garbage/NaN in the overhang can never contribute).
                rows_valid = rows_left - j * _INNER_ROWS
                ridx = jax.lax.broadcasted_iota(jnp.int32, (_INNER_ROWS, _LANES), 0)
                valid = ridx < rows_valid
                x = jnp.where(valid, x, 0.0)
                y = jnp.where(valid, y, 0.0)
            return acc_xy + x * y, acc_s + (x + y)

        zero = jnp.zeros((_INNER_ROWS, _LANES), jnp.float32)
        acc_xy, acc_s = jax.lax.fori_loop(0, n_inner, body, (zero, zero), unroll=unroll)
        sxy_ref[...] += acc_xy
        ssum_ref[...] += acc_s

    if not needs_gate:
        # Grid exactly covers the array: single mask-free path.
        accumulate(masked=False)
    else:
        @pl.when(rows_left >= blk_rows)
        def _full():
            accumulate(masked=False)

        @pl.when(jnp.logical_and(rows_left > 0, rows_left < blk_rows))
        def _tail():
            accumulate(masked=True)


def _partial_sums(x, y, *, block_rows=None):
    """Returns (sum(x*y), sum(x)+sum(y)) as f32 scalars, single HBM pass."""
    assert x.shape == y.shape, (x.shape, y.shape)
    n = math.prod(x.shape)

    xf = x.reshape(-1)
    yf = y.reshape(-1)
    rem = n % _LANES
    if rem:
        # TODO(synk): rare fallback (numel not a multiple of 128): jnp.pad
        # materialises a full HBM copy of both inputs (perf cliff, still correct
        # since zeros add nothing to either sum).
        pad = _LANES - rem
        xf = jnp.pad(xf, (0, pad))
        yf = jnp.pad(yf, (0, pad))
    total_rows = (n + (_LANES - rem) % _LANES) // _LANES

    # Lane-dense (rows, 128) view; every block DMA is a contiguous slab.
    x2 = xf.reshape(total_rows, _LANES)
    y2 = yf.reshape(total_rows, _LANES)

    if block_rows is None:
        bytes_per_row = _LANES * (x.dtype.itemsize + y.dtype.itemsize)
        block_rows = max(_INNER_ROWS,
                         (_TARGET_STEP_BYTES // bytes_per_row) // _INNER_ROWS * _INNER_ROWS)
    blk_rows = min(_round_up(block_rows, _INNER_ROWS), _round_up(total_rows, _INNER_ROWS))
    blk_rows = max(blk_rows, _INNER_ROWS)

    chunks_total = _cdiv(total_rows, blk_rows)
    # Two splits for v7x's two TensorCores, but only when the (at most one)
    # clamped block is negligible / nonexistent (odd small counts stay at 1).
    if chunks_total >= 2 and (chunks_total % 2 == 0 or chunks_total >= 8):
        n_splits = 2
    else:
        n_splits = 1
    chunks_per_split = _cdiv(chunks_total, n_splits)
    covered_rows = n_splits * chunks_per_split * blk_rows
    needs_gate = covered_rows != total_rows
    last_block = chunks_total - 1
    unroll = min(4, max(1, blk_rows // _INNER_ROWS))

    def in_map(s, i):
        # Clamp fully out-of-range blocks (possible when chunks don't split
        # evenly); their contribution is skipped in-kernel.
        return (jnp.minimum(s * chunks_per_split + i, last_block), 0)

    def out_map(s, i):
        return (s, 0)

    kernel = functools.partial(
        _dice_sums_kernel,
        blk_rows=blk_rows,
        chunks_per_split=chunks_per_split,
        total_rows=total_rows,
        needs_gate=needs_gate,
        unroll=unroll,
    )

    part_shape = jax.ShapeDtypeStruct((n_splits * _INNER_ROWS, _LANES), jnp.float32)
    out_bytes = 2 * n_splits * _INNER_ROWS * _LANES * 4
    cost = pl.CostEstimate(
        flops=4 * n,
        transcendentals=0,
        bytes_accessed=n * (x.dtype.itemsize + y.dtype.itemsize) + out_bytes,
    )

    part_xy, part_sum = pl.pallas_call(
        kernel,
        out_shape=(part_shape, part_shape),
        grid_spec=pltpu.PrefetchScalarGridSpec(
            num_scalar_prefetch=0,
            grid=(n_splits, chunks_per_split),
            in_specs=[
                pl.BlockSpec((blk_rows, _LANES), in_map),
                pl.BlockSpec((blk_rows, _LANES), in_map),
            ],
            out_specs=[
                pl.BlockSpec((_INNER_ROWS, _LANES), out_map),
                pl.BlockSpec((_INNER_ROWS, _LANES), out_map),
            ],
        ),
        compiler_params=pltpu.CompilerParams(
            dimension_semantics=("parallel", "arbitrary"),
            vmem_limit_bytes=_VMEM_LIMIT_BYTES,
        ),
        cost_estimate=cost,
    )(x2, y2)

    # Tiny final cross-lane reduce (2 x n_splits x 64 x 128 f32) done in JAX.
    # Note: single-level f32 accumulation per (row,lane); the 8192-way lane
    # spread keeps rounding drift far below 1e-5 for realistic volumes.
    return jnp.sum(part_xy), jnp.sum(part_sum)


@functools.partial(jax.jit, static_argnames=("block_rows",))
def whole_dice_loss(inputs, targets, smooth=1.0, *, block_rows=None):
    """WholeDiceLoss.forward: 1 - (2*sum(x*y)+smooth)/(sum(x)+sum(y)+smooth)."""
    s_xy, s_sum = _partial_sums(inputs, targets, block_rows=block_rows)
    smooth = jnp.asarray(smooth, jnp.float32)
    dice = (2.0 * s_xy + smooth) / (s_sum + smooth)
    return 1.0 - dice


def _reference(inputs, targets, smooth=1.0):
    """Pure-JAX mirror of the PyTorch forward."""
    i = inputs.reshape(-1).astype(jnp.float32)
    t = targets.reshape(-1).astype(jnp.float32)
    inter = jnp.sum(i * t)
    dice = (2.0 * inter + smooth) / (jnp.sum(i) + jnp.sum(t) + smooth)
    return 1.0 - dice


if __name__ == "__main__":
    key = jax.random.PRNGKey(0)
    k1, k2, k3, k4, k5, k6 = jax.random.split(key, 6)

    # Typical UNet-style volume: (B, C, D, H, W) probabilities vs binary target.
    B, C, D, H, W = 2, 4, 8, 16, 16
    probs = jax.nn.sigmoid(jax.random.normal(k1, (B, C, D, H, W), jnp.float32))
    target = (jax.random.uniform(k2, (B, C, D, H, W)) > 0.5).astype(jnp.float32)

    # 18432 elements -> 144 rows of 128 lanes; exercises multi-chunk tail masking.
    wide_in = jax.nn.sigmoid(jax.random.normal(k3, (2, 4, 8, 16, 18), jnp.float32))
    wide_tg = (jax.random.uniform(k4, (2, 4, 8, 16, 18)) > 0.5).astype(jnp.float32)

    # 69632 elements -> 544 rows; with block_rows=64 gives 9 chunks ->
    # 2 parallel splits + masked tail + a fully-OOB clamped block.
    big_in = jax.nn.sigmoid(jax.random.normal(k5, (4, 17, 8, 16, 16), jnp.float32))
    big_tg = (jax.random.uniform(k6, (4, 17, 8, 16, 16)) > 0.5).astype(jnp.float32)

    # 1890 elements -> not a multiple of 128 -> exercises the pad fallback.
    odd_in = jax.nn.sigmoid(jax.random.normal(k3, (2, 3, 5, 7, 9), jnp.float32))
    odd_tg = (jax.random.uniform(k4, (2, 3, 5, 7, 9)) > 0.5).astype(jnp.float32)

    cases = [
        ("f32_default", probs, target, None),
        ("bf16_inputs", probs.astype(jnp.bfloat16), target.astype(jnp.bfloat16), None),
        ("multi_chunk_tail_mask", wide_in, wide_tg, 64),
        ("partial_inner_chunk", wide_in, wide_tg, 128),
        ("two_splits_oob_clamp", big_in, big_tg, 64),
        ("pad_fallback", odd_in, odd_tg, None),
    ]

    ok = True
    for name, a, b, br in cases:
        loss = jax.block_until_ready(whole_dice_loss(a, b, block_rows=br))
        ref = jax.block_until_ready(_reference(a, b))
        if not jnp.allclose(loss, ref, rtol=1e-5, atol=1e-5):
            ok = False
            print(f"MISMATCH [{name}]: kernel={float(loss)} ref={float(ref)}")

    if ok:
        print("KERNEL_OK")
</pallas_src>

<mosaic_0001>
module attributes {stable_mosaic.version = 11 : i64} {
  func.func @_dice_sums_kernel(%arg0: i32, %arg1: i32, %arg2: memref<128x128xf32, #tpu.memory_space<vmem>>, %arg3: memref<128x128xf32, #tpu.memory_space<vmem>>, %arg4: memref<64x128xf32, #tpu.memory_space<vmem>>, %arg5: memref<64x128xf32, #tpu.memory_space<vmem>>) attributes {dimension_semantics = [#tpu.dimension_semantics<parallel>, #tpu.dimension_semantics<arbitrary>], iteration_bounds = array<i64: 1, 1>, scalar_prefetch = 0 : i64, scratch_operands = 0 : i64, tpu.core_type = #tpu.core_type<tc>, window_params = [{transform_indices = @transform_0, window_bounds = array<i64: 128, 128>}, {transform_indices = @transform_1, window_bounds = array<i64: 128, 128>}, {transform_indices = @transform_2, window_bounds = array<i64: 64, 128>}, {transform_indices = @transform_3, window_bounds = array<i64: 64, 128>}]} {
    %c0_i32 = arith.constant 0 : i32
    %0 = arith.cmpi eq, %arg1, %c0_i32 : i32
    %1 = arith.extui %0 : i1 to i32
    %c0_i32_0 = arith.constant 0 : i32
    %2 = arith.cmpi ne, %1, %c0_i32_0 : i32
    scf.if %2 {
      %cst_14 = arith.constant 0.000000e+00 : f32
      %30 = vector.broadcast %cst_14 : f32 to vector<64x128xf32>
      %c0_15 = arith.constant 0 : index
      %c0_16 = arith.constant 0 : index
      %31 = vector.load %arg4[%c0_15, %c0_16] : memref<64x128xf32, #tpu.memory_space<vmem>>, vector<64x128xf32>
      tpu.vector_store %arg4[%c0_15, %c0_16], %30 {strides = array<i32>} : memref<64x128xf32, #tpu.memory_space<vmem>>, vector<64x128xf32>,
      %cst_17 = arith.constant 0.000000e+00 : f32
      %32 = vector.broadcast %cst_17 : f32 to vector<64x128xf32>
      %c0_18 = arith.constant 0 : index
      %c0_19 = arith.constant 0 : index
      %33 = vector.load %arg5[%c0_18, %c0_19] : memref<64x128xf32, #tpu.memory_space<vmem>>, vector<64x128xf32>
      tpu.vector_store %arg5[%c0_18, %c0_19], %32 {strides = array<i32>} : memref<64x128xf32, #tpu.memory_space<vmem>>, vector<64x128xf32>,
    } else {
    }
    %cst = arith.constant 0.000000e+00 : f32
    %3 = vector.broadcast %cst : f32 to vector<64x128xf32>
    %c0_i32_1 = arith.constant 0 : i32
    %c64_i32 = arith.constant 64 : i32
    %4 = arith.muli %c0_i32_1, %c64_i32 : i32
    %5 = tpu.assume_multiple %4, 64 : i32
    %6 = arith.index_cast %5 : i32 to index
    %c0 = arith.constant 0 : index
    %7 = vector.load %arg2[%6, %c0] : memref<128x128xf32, #tpu.memory_space<vmem>>, vector<64x128xf32>
    %8 = arith.index_cast %5 : i32 to index
    %c0_2 = arith.constant 0 : index
    %9 = vector.load %arg3[%8, %c0_2] : memref<128x128xf32, #tpu.memory_space<vmem>>, vector<64x128xf32>
    %10 = arith.mulf %7, %9 : vector<64x128xf32>
    %11 = arith.addf %3, %10 : vector<64x128xf32>
    %12 = arith.addf %7, %9 : vector<64x128xf32>
    %13 = arith.addf %3, %12 : vector<64x128xf32>
    %c1_i32 = arith.constant 1 : i32
    %c64_i32_3 = arith.constant 64 : i32
    %14 = arith.muli %c1_i32, %c64_i32_3 : i32
    %15 = tpu.assume_multiple %14, 64 : i32
    %16 = arith.index_cast %15 : i32 to index
    %c0_4 = arith.constant 0 : index
    %17 = vector.load %arg2[%16, %c0_4] : memref<128x128xf32, #tpu.memory_space<vmem>>, vector<64x128xf32>
    %18 = arith.index_cast %15 : i32 to index
    %c0_5 = arith.constant 0 : index
    %19 = vector.load %arg3[%18, %c0_5] : memref<128x128xf32, #tpu.memory_space<vmem>>, vector<64x128xf32>
    %20 = arith.mulf %17, %19 : vector<64x128xf32>
    %21 = arith.addf %11, %20 : vector<64x128xf32>
    %22 = arith.addf %17, %19 : vector<64x128xf32>
    %23 = arith.addf %13, %22 : vector<64x128xf32>
    %c2_i32 = arith.constant 2 : i32
    %c0_6 = arith.constant 0 : index
    %c0_7 = arith.constant 0 : index
    %24 = vector.load %arg4[%c0_6, %c0_7] : memref<64x128xf32, #tpu.memory_space<vmem>>, vector<64x128xf32>
    %25 = arith.addf %24, %21 : vector<64x128xf32>
    %c0_8 = arith.constant 0 : index
    %c0_9 = arith.constant 0 : index
    %26 = vector.load %arg4[%c0_8, %c0_9] : memref<64x128xf32, #tpu.memory_space<vmem>>, vector<64x128xf32>
    tpu.vector_store %arg4[%c0_8, %c0_9], %25 {strides = array<i32>} : memref<64x128xf32, #tpu.memory_space<vmem>>, vector<64x128xf32>,
    %c0_10 = arith.constant 0 : index
    %c0_11 = arith.constant 0 : index
    %27 = vector.load %arg5[%c0_10, %c0_11] : memref<64x128xf32, #tpu.memory_space<vmem>>, vector<64x128xf32>
    %28 = arith.addf %27, %23 : vector<64x128xf32>
    %c0_12 = arith.constant 0 : index
    %c0_13 = arith.constant 0 : index
    %29 = vector.load %arg5[%c0_12, %c0_13] : memref<64x128xf32, #tpu.memory_space<vmem>>, vector<64x128xf32>
    tpu.vector_store %arg5[%c0_12, %c0_13], %28 {strides = array<i32>} : memref<64x128xf32, #tpu.memory_space<vmem>>, vector<64x128xf32>,
    return
  }
  func.func @transform_0(%arg0: i32, %arg1: i32) -> (i32, i32) {
    %c1_i32 = arith.constant 1 : i32
    %0 = arith.muli %arg0, %c1_i32 : i32
    %1 = arith.addi %0, %arg1 : i32
    %c0_i32 = arith.constant 0 : i32
    %2 = arith.minsi %1, %c0_i32 : i32
    %c0_i32_0 = arith.constant 0 : i32
    %c0_i32_1 = arith.constant 0 : i32
    return %2, %c0_i32_0 : i32, i32
  }
  func.func @transform_1(%arg0: i32, %arg1: i32) -> (i32, i32) {
    %c1_i32 = arith.constant 1 : i32
    %0 = arith.muli %arg0, %c1_i32 : i32
    %1 = arith.addi %0, %arg1 : i32
    %c0_i32 = arith.constant 0 : i32
    %2 = arith.minsi %1, %c0_i32 : i32
    %c0_i32_0 = arith.constant 0 : i32
    %c0_i32_1 = arith.constant 0 : i32
    return %2, %c0_i32_0 : i32, i32
  }
  func.func @transform_2(%arg0: i32, %arg1: i32) -> (i32, i32) {
    %c0_i32 = arith.constant 0 : i32
    %c0_i32_0 = arith.constant 0 : i32
    return %arg0, %c0_i32 : i32, i32
  }
  func.func @transform_3(%arg0: i32, %arg1: i32) -> (i32, i32) {
    %c0_i32 = arith.constant 0 : i32
    %c0_i32_0 = arith.constant 0 : i32
    return %arg0, %c0_i32 : i32, i32
  }
}

</mosaic_0001>

<llo_original>
// kernel: whole_dice_loss.1
$region0: #{whole_dice_loss.1}
  #allocation0 [shape = 'u32[]', space=smem, size = 0x4, offset = 0x4, fixed_abs, tag = 'smem constant byte address 0x4 - core index']
  #allocation1 [shape = 'u32[144,128]{1,0:T(1,128)}', space=vmem, size = 0x12000, scoped, tag = 'internal scratch']
  %s0 = inlined_call_operand.vmem [shape: f32[128,128], index: 0, kind: input, shape index: {}]
  %s1 = inlined_call_operand.vmem [shape: f32[128,128], index: 1, kind: input, shape index: {}]
  %s2 = inlined_call_operand.vmem [shape: f32[64,128], index: 2, kind: output, shape index: {0}]
  %s3 = inlined_call_operand.vmem [shape: f32[64,128], index: 3, kind: output, shape index: {1}]
  %4 = xla_tuple %s2, %s3
  %s5 = sld [smem:[#allocation0]]
  $region30: #{whole_dice_loss.1} parent=0
    _
  %s7 = ssub.s32 1, %s5
  %s8 = scalar_select 0, %s7, %s5
  // Predicated region
  $region2: #{whole_dice_loss.1} parent=0 // pred_check
    _
  $region3: #{whole_dice_loss.1} parent=0 // pred_check_branch
    %10 = sbr.rel (0) target = $region5
  $region4: #{whole_dice_loss.1} parent=0 // pred_region
    %s11 = sadd.s32 0, 0
    %p12 = scmp.lt.s32.totalorder %s11, 0
    %s13 = scalar_select %p12, %s11, 0
    %s14 = smul.u32 16, %s13
    %p15 = scmp.lt.s32.totalorder %s14, 15
    %s16 = scalar_select %p15, %s14, 15
    %s17 = smul.addr %s16, 8
    %s18 = scalar_lea.vmem %s0, %s17
    %s19 = sadd.s32 0, 0
    %p20 = scmp.lt.s32.totalorder %s19, 0
    %s21 = scalar_select %p20, %s19, 0
    %s22 = smul.u32 16, %s21
  $region5: #{whole_dice_loss.1} parent=0 // pred_fallthru
    _
  // Predicated region
  $region6: #{whole_dice_loss.1} parent=0 // pred_check
    _
  $region7: #{whole_dice_loss.1} parent=0 // pred_check_branch
    %24 = sbr.rel (0) target = $region9
  $region8: #{whole_dice_loss.1} parent=0 // pred_region
    %s25 = sadd.s32 0, 0
    %p26 = scmp.lt.s32.totalorder %s25, 0
    %s27 = scalar_select %p26, %s25, 0
    %s28 = smul.u32 16, %s27
    %p29 = scmp.lt.s32.totalorder %s28, 15
    %s30 = scalar_select %p29, %s28, 15
    %s31 = smul.addr %s30, 8
    %s32 = scalar_lea.vmem %s1, %s31
    %s33 = sadd.s32 0, 0
    %p34 = scmp.lt.s32.totalorder %s33, 0
    %s35 = scalar_select %p34, %s33, 0
    %s36 = smul.u32 16, %s35
  $region9: #{whole_dice_loss.1} parent=0 // pred_fallthru
    _
  %s37 = sadd.s32 0, 0
  %p38 = scmp.lt.s32.totalorder %s37, 0
  %s39 = scalar_select %p38, %s37, 0
  %s40 = smul.u32 16, %s39
  %p41 = scmp.lt.s32.totalorder %s40, 15
  %s42 = scalar_select %p41, %s40, 15
  %s43 = smul.addr %s42, 8
  %s44 = scalar_lea.vmem %s0, %s43
  %s45 = sadd.s32 0, 0
  %p46 = scmp.lt.s32.totalorder %s45, 0
  %s47 = scalar_select %p46, %s45, 0
  %s48 = smul.u32 16, %s47
  %p49 = scmp.lt.s32.totalorder %s48, 15
  %s50 = scalar_select %p49, %s48, 15
  %s51 = smul.addr %s50, 8
  %s52 = scalar_lea.vmem %s1, %s51
  %s53 = sadd.s32 0, 0
  %p54 = scmp.lt.s32.totalorder %s53, 0
  %s55 = scalar_select %p54, %s53, 0
  %s56 = smul.u32 16, %s55
  %p57 = scmp.lt.s32.totalorder %s56, 15
  %s58 = scalar_select %p57, %s56, 15
  %s59 = smul.addr %s58, 8
  %s60 = scalar_lea.vmem %s0, %s59
  %s61 = sadd.s32 0, 0
  %p62 = scmp.lt.s32.totalorder %s61, 0
  %s63 = scalar_select %p62, %s61, 0
  %s64 = smul.u32 16, %s63
  %s65 = sadd.s32 0, 0
  %p66 = scmp.lt.s32.totalorder %s65, 0
  %s67 = scalar_select %p66, %s65, 0
  %s68 = smul.u32 16, %s67
  %p69 = scmp.lt.s32.totalorder %s68, 15
  %s70 = scalar_select %p69, %s68, 15
  %s71 = smul.addr %s70, 8
  %s72 = scalar_lea.vmem %s1, %s71
  %s73 = sadd.s32 0, 0
  %p74 = scmp.lt.s32.totalorder %s73, 0
  %s75 = scalar_select %p74, %s73, 0
  %s76 = smul.u32 16, %s75
  %p77 = scmp.eq.s32.totalorder 0, 0
  // Predicated region
  $region10: #{whole_dice_loss.1} parent=0 // pred_check
    %p78 = pneg %p77
  $region11: #{whole_dice_loss.1} parent=0 // pred_check_branch
    %80 = sbr.rel (%p78) target = $region13
  $region12: #{whole_dice_loss.1} parent=0 // pred_region
    %81 = vst [vmem:[%s2] sm:$0xff] 0.0
    %82 = vst [vmem:[%s2 + $0x8] sm:$0xff] 0.0
    %83 = vst [vmem:[%s2 + $0x10] sm:$0xff] 0.0
    %84 = vst [vmem:[%s2 + $0x18] sm:$0xff] 0.0
    %85 = vst [vmem:[%s2 + $0x20] sm:$0xff] 0.0
    %86 = vst [vmem:[%s2 + $0x28] sm:$0xff] 0.0
    %87 = vst [vmem:[%s2 + $0x30] sm:$0xff] 0.0
    %88 = vst [vmem:[%s2 + $0x38] sm:$0xff] 0.0
    %89 = vst [vmem:[%s3] sm:$0xff] 0.0
    %90 = vst [vmem:[%s3 + $0x8] sm:$0xff] 0.0
    %91 = vst [vmem:[%s3 + $0x10] sm:$0xff] 0.0
    %92 = vst [vmem:[%s3 + $0x18] sm:$0xff] 0.0
    %93 = vst [vmem:[%s3 + $0x20] sm:$0xff] 0.0
    %94 = vst [vmem:[%s3 + $0x28] sm:$0xff] 0.0
    %95 = vst [vmem:[%s3 + $0x30] sm:$0xff] 0.0
    %96 = vst [vmem:[%s3 + $0x38] sm:$0xff] 0.0
  $region13: #{whole_dice_loss.1} parent=0 // pred_fallthru
    _
  %v97 = vld [vmem:[%s60] sm:$0xff]
  %v98 = vld [vmem:[%s60 + $0x8] sm:$0xff]
  %v99 = vld [vmem:[%s60 + $0x10] sm:$0xff]
  %v100 = vld [vmem:[%s60 + $0x18] sm:$0xff]
  %v101 = vld [vmem:[%s60 + $0x20] sm:$0xff]
  %v102 = vld [vmem:[%s60 + $0x28] sm:$0xff]
  %v103 = vld [vmem:[%s60 + $0x30] sm:$0xff]
  %v104 = vld [vmem:[%s60 + $0x38] sm:$0xff]
  %v105 = vld [vmem:[%s72] sm:$0xff]
  %v106 = vld [vmem:[%s72 + $0x8] sm:$0xff]
  %v107 = vld [vmem:[%s72 + $0x10] sm:$0xff]
  %v108 = vld [vmem:[%s72 + $0x18] sm:$0xff]
  %v109 = vld [vmem:[%s72 + $0x20] sm:$0xff]
  %v110 = vld [vmem:[%s72 + $0x28] sm:$0xff]
  %v111 = vld [vmem:[%s72 + $0x30] sm:$0xff]
  %v112 = vld [vmem:[%s72 + $0x38] sm:$0xff]
  %v113 = vmul.f32 %v97, %v105
  %v114 = vmul.f32 %v98, %v106
  %v115 = vmul.f32 %v99, %v107
  %v116 = vmul.f32 %v100, %v108
  %v117 = vmul.f32 %v101, %v109
  %v118 = vmul.f32 %v102, %v110
  %v119 = vmul.f32 %v103, %v111
  %v120 = vmul.f32 %v104, %v112
  %v121 = vadd.f32 %v113, 0.0
  %v122 = vadd.f32 %v114, 0.0
  %v123 = vadd.f32 %v115, 0.0
  %v124 = vadd.f32 %v116, 0.0
  %v125 = vadd.f32 %v117, 0.0
  %v126 = vadd.f32 %v118, 0.0
  %v127 = vadd.f32 %v119, 0.0
  %v128 = vadd.f32 %v120, 0.0
  %v129 = vadd.f32 %v97, %v105
  %v130 = vadd.f32 %v98, %v106
  %v131 = vadd.f32 %v99, %v107
  %v132 = vadd.f32 %v100, %v108
  %v133 = vadd.f32 %v101, %v109
  %v134 = vadd.f32 %v102, %v110
  %v135 = vadd.f32 %v103, %v111
  %v136 = vadd.f32 %v104, %v112
  %v137 = vadd.f32 %v129, 0.0
  %v138 = vadd.f32 %v130, 0.0
  %v139 = vadd.f32 %v131, 0.0
  %v140 = vadd.f32 %v132, 0.0
  %v141 = vadd.f32 %v133, 0.0
  %v142 = vadd.f32 %v134, 0.0
  %v143 = vadd.f32 %v135, 0.0
  %v144 = vadd.f32 %v136, 0.0
  %s145 = scalar_lea.vmem %s60, 64
  %v146 = vld [vmem:[%s145] sm:$0xff]
  %v147 = vld [vmem:[%s145 + $0x8] sm:$0xff]
  %v148 = vld [vmem:[%s145 + $0x10] sm:$0xff]
  %v149 = vld [vmem:[%s145 + $0x18] sm:$0xff]
  %v150 = vld [vmem:[%s145 + $0x20] sm:$0xff]
  %v151 = vld [vmem:[%s145 + $0x28] sm:$0xff]
  %v152 = vld [vmem:[%s145 + $0x30] sm:$0xff]
  %v153 = vld [vmem:[%s145 + $0x38] sm:$0xff]
  %s154 = scalar_lea.vmem %s72, 64
  %v155 = vld [vmem:[%s154] sm:$0xff]
  %v156 = vld [vmem:[%s154 + $0x8] sm:$0xff]
  %v157 = vld [vmem:[%s154 + $0x10] sm:$0xff]
  %v158 = vld [vmem:[%s154 + $0x18] sm:$0xff]
  %v159 = vld [vmem:[%s154 + $0x20] sm:$0xff]
  %v160 = vld [vmem:[%s154 + $0x28] sm:$0xff]
  %v161 = vld [vmem:[%s154 + $0x30] sm:$0xff]
  %v162 = vld [vmem:[%s154 + $0x38] sm:$0xff]
  %v163 = vmul.f32 %v146, %v155
  %v164 = vmul.f32 %v147, %v156
  %v165 = vmul.f32 %v148, %v157
  %v166 = vmul.f32 %v149, %v158
  %v167 = vmul.f32 %v150, %v159
  %v168 = vmul.f32 %v151, %v160
  %v169 = vmul.f32 %v152, %v161
  %v170 = vmul.f32 %v153, %v162
  %v171 = vadd.f32 %v121, %v163
  %v172 = vadd.f32 %v122, %v164
  %v173 = vadd.f32 %v123, %v165
  %v174 = vadd.f32 %v124, %v166
  %v175 = vadd.f32 %v125, %v167
  %v176 = vadd.f32 %v126, %v168
  %v177 = vadd.f32 %v127, %v169
  %v178 = vadd.f32 %v128, %v170
  %v179 = vadd.f32 %v146, %v155
  %v180 = vadd.f32 %v147, %v156
  %v181 = vadd.f32 %v148, %v157
  %v182 = vadd.f32 %v149, %v158
  %v183 = vadd.f32 %v150, %v159
  %v184 = vadd.f32 %v151, %v160
  %v185 = vadd.f32 %v152, %v161
  %v186 = vadd.f32 %v153, %v162
  %v187 = vadd.f32 %v137, %v179
  %v188 = vadd.f32 %v138, %v180
  %v189 = vadd.f32 %v139, %v181
  %v190 = vadd.f32 %v140, %v182
  %v191 = vadd.f32 %v141, %v183
  %v192 = vadd.f32 %v142, %v184
  %v193 = vadd.f32 %v143, %v185
  %v194 = vadd.f32 %v144, %v186
  %v195 = vld [vmem:[%s2] sm:$0xff]
  %v196 = vld [vmem:[%s2 + $0x8] sm:$0xff]
  %v197 = vld [vmem:[%s2 + $0x10] sm:$0xff]
  %v198 = vld [vmem:[%s2 + $0x18] sm:$0xff]
  %v199 = vld [vmem:[%s2 + $0x20] sm:$0xff]
  %v200 = vld [vmem:[%s2 + $0x28] sm:$0xff]
  %v201 = vld [vmem:[%s2 + $0x30] sm:$0xff]
  %v202 = vld [vmem:[%s2 + $0x38] sm:$0xff]
  %v203 = vadd.f32 %v195, %v171
  %v204 = vadd.f32 %v196, %v172
  %v205 = vadd.f32 %v197, %v173
  %v206 = vadd.f32 %v198, %v174
  %v207 = vadd.f32 %v199, %v175
  %v208 = vadd.f32 %v200, %v176
  %v209 = vadd.f32 %v201, %v177
  %v210 = vadd.f32 %v202, %v178
  %211 = vst [vmem:[%s2] sm:$0xff] %v203
  %212 = vst [vmem:[%s2 + $0x8] sm:$0xff] %v204
  %213 = vst [vmem:[%s2 + $0x10] sm:$0xff] %v205
  %214 = vst [vmem:[%s2 + $0x18] sm:$0xff] %v206
  %215 = vst [vmem:[%s2 + $0x20] sm:$0xff] %v207
  %216 = vst [vmem:[%s2 + $0x28] sm:$0xff] %v208
  %217 = vst [vmem:[%s2 + $0x30] sm:$0xff] %v209
  %218 = vst [vmem:[%s2 + $0x38] sm:$0xff] %v210
  %v219 = vld [vmem:[%s3] sm:$0xff]
  %v220 = vld [vmem:[%s3 + $0x8] sm:$0xff]
  %v221 = vld [vmem:[%s3 + $0x10] sm:$0xff]
  %v222 = vld [vmem:[%s3 + $0x18] sm:$0xff]
  %v223 = vld [vmem:[%s3 + $0x20] sm:$0xff]
  %v224 = vld [vmem:[%s3 + $0x28] sm:$0xff]
  %v225 = vld [vmem:[%s3 + $0x30] sm:$0xff]
  %v226 = vld [vmem:[%s3 + $0x38] sm:$0xff]
  %v227 = vadd.f32 %v219, %v187
  %v228 = vadd.f32 %v220, %v188
  %v229 = vadd.f32 %v221, %v189
  %v230 = vadd.f32 %v222, %v190
  %v231 = vadd.f32 %v223, %v191
  %v232 = vadd.f32 %v224, %v192
  %v233 = vadd.f32 %v225, %v193
  %v234 = vadd.f32 %v226, %v194
  %235 = vst [vmem:[%s3] sm:$0xff] %v227
  %236 = vst [vmem:[%s3 + $0x8] sm:$0xff] %v228
  %237 = vst [vmem:[%s3 + $0x10] sm:$0xff] %v229
  %238 = vst [vmem:[%s3 + $0x18] sm:$0xff] %v230
  %239 = vst [vmem:[%s3 + $0x20] sm:$0xff] %v231
  %240 = vst [vmem:[%s3 + $0x28] sm:$0xff] %v232
  %241 = vst [vmem:[%s3 + $0x30] sm:$0xff] %v233
  %242 = vst [vmem:[%s3 + $0x38] sm:$0xff] %v234
  // Predicated region
  $region14: #{whole_dice_loss.1} parent=0 // pred_check
    _
  $region15: #{whole_dice_loss.1} parent=0 // pred_check_branch
    %244 = sbr.rel (0) target = $region17
  $region16: #{whole_dice_loss.1} parent=0 // pred_region
    _
  $region17: #{whole_dice_loss.1} parent=0 // pred_fallthru
    _
  // Predicated region
  $region18: #{whole_dice_loss.1} parent=0 // pred_check
    _
  $region19: #{whole_dice_loss.1} parent=0 // pred_check_branch
    %246 = sbr.rel (0) target = $region21
  $region20: #{whole_dice_loss.1} parent=0 // pred_region
    _
  $region21: #{whole_dice_loss.1} parent=0 // pred_fallthru
    _
  // Predicated region
  $region22: #{whole_dice_loss.1} parent=0 // pred_check
    _
  $region23: #{whole_dice_loss.1} parent=0 // pred_check_branch
    %248 = sbr.rel (0) target = $region25
  $region24: #{whole_dice_loss.1} parent=0 // pred_region
    _
  $region25: #{whole_dice_loss.1} parent=0 // pred_fallthru
    _
  // Predicated region
  $region26: #{whole_dice_loss.1} parent=0 // pred_check
    _
  $region27: #{whole_dice_loss.1} parent=0 // pred_check_branch
    %250 = sbr.rel (0) target = $region29
  $region28: #{whole_dice_loss.1} parent=0 // pred_region
    _
  $region29: #{whole_dice_loss.1} parent=0 // pred_fallthru
    _

</llo_original>
